<compile_context>
chip_gen: v7x
topology: tpu7x:2x2x1
jax: 0.10.0
libtpu: 0.0.40
codegen_flags: <defaults>
</compile_context>

<pallas_src>
import functools

import jax
import jax.numpy as jnp
from jax.experimental import pallas as pl
from jax.experimental.pallas import tpu as pltpu


# ---------------------------------------------------------------------------
# Fused kernel: pool + MLP + gate on one image's (C, HW) slab.
# ---------------------------------------------------------------------------

def _se_fused_kernel(x_ref, w1_ref, b1_ref, w2_ref, b2_ref, o_ref, *, inv_hw):
    x = x_ref[0]                                             # (C, HW) native dtype

    # 1) Global average pool, f32 accumulation -> per-channel column (C, 1).
    p = jnp.sum(x.astype(jnp.float32), axis=1, keepdims=True) * inv_hw

    # 2) fc1 -> ReLU -> fc2 -> sigmoid, all f32.  Broadcast the pooled column
    #    to 128 lanes so both matmuls have a lane-native output width (all 128
    #    columns identical); slice one column back out at the end.
    p_b = jnp.broadcast_to(p, (p.shape[0], 128))             # (C, 128)
    h = jnp.dot(w1_ref[...], p_b, preferred_element_type=jnp.float32) + b1_ref[...]
    h = jnp.maximum(h, 0.0)                                  # (Cs, 128)
    s = jnp.dot(w2_ref[...], h, preferred_element_type=jnp.float32) + b2_ref[...]
    scale = 1.0 / (1.0 + jnp.exp(-s[:, 0:1]))                # (C, 1) f32

    # 3) Channel gating in the input's native dtype (single cast of the scale).
    o_ref[0] = (x * scale.astype(x.dtype)).astype(o_ref.dtype)


# ---------------------------------------------------------------------------
# Fallback kernels (slab too large for VMEM residency): two streaming passes.
# ---------------------------------------------------------------------------

def _pool_rows_kernel(x_ref, o_ref, *, inv_hw):
    """Per-row mean of a (tm, HW) block, f32 accumulation."""
    o_ref[...] = jnp.sum(x_ref[...].astype(jnp.float32), axis=1,
                         keepdims=True) * inv_hw


def _gate_rows_kernel(x_ref, s_ref, o_ref):
    """out = x * per-row scale, multiplied in the input's native dtype."""
    x = x_ref[...]                                           # (tm, HW)
    o_ref[...] = (x * s_ref[...].astype(x.dtype)).astype(o_ref.dtype)


# ---------------------------------------------------------------------------
# Tiling helpers
# ---------------------------------------------------------------------------

def _row_tile(m, hw, itemsize, target_bytes):
    """Largest multiple-of-8 divisor of m whose (rows, hw) block ~fits target."""
    if m * hw * itemsize <= target_bytes:
        return m
    if m % 8 != 0:
        # TODO(synk): pad M up to a multiple of 8 instead of a whole-dim block.
        return m
    max_rows = max(8, target_bytes // max(1, hw * itemsize))
    t = min(m, (max_rows // 8) * 8)
    while t >= 8:
        if m % t == 0:
            return t
        t -= 8
    return 8


def _vmem_limit(block_bytes):
    # Headroom-capped: v7x physical VMEM is 64 MiB, so never ask for more
    # than 48 MiB; never ask for less than 16 MiB.
    return int(min(48 << 20, max(16 << 20, block_bytes)))


# ---------------------------------------------------------------------------
# Public wrapper
# ---------------------------------------------------------------------------

def squeeze_excitation(x_nchw, fc1_w, fc1_b, fc2_w, fc2_b, *,
                       fused_slab_budget_bytes=24 << 20,
                       target_block_bytes=4 << 20):
    """Squeeze-and-Excitation forward pass.

    x_nchw: (N, C, H, W)
    fc1_w:  (Cs, C), fc1_b: (Cs,)   (1x1 Conv2d == linear over channels)
    fc2_w:  (C, Cs), fc2_b: (C,)
    """
    N, C, H, W = x_nchw.shape
    dtype = x_nchw.dtype
    HW = H * W
    M = N * C
    itemsize = jnp.dtype(dtype).itemsize

    w1 = fc1_w.astype(jnp.float32)                      # (Cs, C)
    w2 = fc2_w.astype(jnp.float32)                      # (C, Cs)
    Cs = w1.shape[0]
    b1 = fc1_b.reshape(Cs, 1).astype(jnp.float32)       # (Cs, 1)
    b2 = fc2_b.reshape(C, 1).astype(jnp.float32)        # (C, 1)

    # -------- Fused one-pass path: whole (C, HW) slab per image in VMEM -----
    fused_need = 4 * C * HW * itemsize                  # double-buffered in+out
    if fused_need <= fused_slab_budget_bytes:
        x3d = x_nchw.reshape(N, C, HW)                  # free reshape (no copy)
        weight_bytes = 4 * (w1.size + b1.size + w2.size + b2.size)
        vlim = _vmem_limit(fused_need + 2 * weight_bytes + (2 << 20))
        out3d = pl.pallas_call(
            functools.partial(_se_fused_kernel, inv_hw=1.0 / HW),
            out_shape=jax.ShapeDtypeStruct((N, C, HW), dtype),
            grid_spec=pltpu.PrefetchScalarGridSpec(
                num_scalar_prefetch=0,
                grid=(N,),
                in_specs=[
                    pl.BlockSpec((1, C, HW), lambda n: (n, 0, 0)),
                    pl.BlockSpec((Cs, C), lambda n: (0, 0)),   # resident weights
                    pl.BlockSpec((Cs, 1), lambda n: (0, 0)),
                    pl.BlockSpec((C, Cs), lambda n: (0, 0)),
                    pl.BlockSpec((C, 1), lambda n: (0, 0)),
                ],
                out_specs=pl.BlockSpec((1, C, HW), lambda n: (n, 0, 0)),
            ),
            compiler_params=pltpu.CompilerParams(
                dimension_semantics=("parallel",),
                vmem_limit_bytes=vlim),
        )(x3d, w1, b1, w2, b2)
        return out3d.reshape(N, C, H, W)

    # -------- Fallback: streaming pool pass + jnp MLP + streaming gate pass --
    x2d = x_nchw.reshape(M, HW)
    tm = _row_tile(M, HW, itemsize, target_block_bytes)
    grid = (M // tm,)
    row_block = tm * HW * itemsize
    vlim = _vmem_limit(4 * row_block + (4 << 20))

    pooled = pl.pallas_call(
        functools.partial(_pool_rows_kernel, inv_hw=1.0 / HW),
        out_shape=jax.ShapeDtypeStruct((M, 1), jnp.float32),
        grid_spec=pltpu.PrefetchScalarGridSpec(
            num_scalar_prefetch=0,
            grid=grid,
            in_specs=[pl.BlockSpec((tm, HW), lambda i: (i, 0))],
            out_specs=pl.BlockSpec((tm, 1), lambda i: (i, 0)),
        ),
        compiler_params=pltpu.CompilerParams(
            dimension_semantics=("parallel",),
            vmem_limit_bytes=vlim),
    )(x2d)

    # Tiny MLP in plain jnp (a few KB of FLOPs; no dedicated kernel needed).
    p_nc = pooled.reshape(N, C)
    h = jnp.maximum(jnp.dot(p_nc, w1.T) + b1.reshape(1, Cs), 0.0)
    s = jnp.dot(h, w2.T) + b2.reshape(1, C)
    scale_rows = (1.0 / (1.0 + jnp.exp(-s))).reshape(M, 1)

    out2d = pl.pallas_call(
        _gate_rows_kernel,
        out_shape=jax.ShapeDtypeStruct((M, HW), dtype),
        grid_spec=pltpu.PrefetchScalarGridSpec(
            num_scalar_prefetch=0,
            grid=grid,
            in_specs=[pl.BlockSpec((tm, HW), lambda i: (i, 0)),
                      pl.BlockSpec((tm, 1), lambda i: (i, 0))],
            out_specs=pl.BlockSpec((tm, HW), lambda i: (i, 0)),
        ),
        compiler_params=pltpu.CompilerParams(
            dimension_semantics=("parallel",),
            vmem_limit_bytes=vlim),
    )(x2d, scale_rows)
    return out2d.reshape(N, C, H, W)


# ---------------------------------------------------------------------------
# Reference + test
# ---------------------------------------------------------------------------

def _reference(x, w1, b1, w2, b2):
    pooled = jnp.mean(x, axis=(2, 3))                          # (N, C)
    h = jnp.maximum(pooled @ w1.T + b1, 0.0)                   # (N, Cs)
    s = 1.0 / (1.0 + jnp.exp(-(h @ w2.T + b2)))                # (N, C)
    return x * s[:, :, None, None]


if __name__ == "__main__":
    key = jax.random.PRNGKey(0)
    kx, k1, k2, k3, k4, kx2 = jax.random.split(key, 6)

    N, C, H, W, Cs = 2, 4, 16, 16, 2
    x = jax.random.normal(kx, (N, C, H, W), dtype=jnp.float32)
    fc1_w = 0.5 * jax.random.normal(k1, (Cs, C), dtype=jnp.float32)
    fc1_b = 0.1 * jax.random.normal(k2, (Cs,), dtype=jnp.float32)
    fc2_w = 0.5 * jax.random.normal(k3, (C, Cs), dtype=jnp.float32)
    fc2_b = 0.1 * jax.random.normal(k4, (C,), dtype=jnp.float32)

    # --- Fused one-pass path (grid=(N,) > 1 so both v7x TCs get blocks) -----
    out = jax.block_until_ready(
        squeeze_excitation(x, fc1_w, fc1_b, fc2_w, fc2_b))
    ref = _reference(x, fc1_w, fc1_b, fc2_w, fc2_b)
    assert out.shape == (N, C, H, W)
    assert jnp.allclose(out, ref, atol=1e-5, rtol=1e-5), float(
        jnp.max(jnp.abs(out - ref)))

    # --- Streaming fallback path, forced via tiny budgets (multi-block grid) -
    N2 = 4
    x2 = jax.random.normal(kx2, (N2, C, H, W), dtype=jnp.float32)
    out2 = jax.block_until_ready(
        squeeze_excitation(x2, fc1_w, fc1_b, fc2_w, fc2_b,
                           fused_slab_budget_bytes=0,
                           target_block_bytes=8 * H * W * 4))
    ref2 = _reference(x2, fc1_w, fc1_b, fc2_w, fc2_b)
    assert out2.shape == (N2, C, H, W)
    assert jnp.allclose(out2, ref2, atol=1e-5, rtol=1e-5), float(
        jnp.max(jnp.abs(out2 - ref2)))

    print("KERNEL_OK")
</pallas_src>

<mosaic_0001>
module attributes {stable_mosaic.version = 11 : i64} {
  func.func @_se_fused_kernel(%arg0: i32, %arg1: memref<1x4x256xf32, #tpu.memory_space<vmem>>, %arg2: memref<2x4xf32, #tpu.memory_space<vmem>>, %arg3: memref<2x1xf32, #tpu.memory_space<vmem>>, %arg4: memref<4x2xf32, #tpu.memory_space<vmem>>, %arg5: memref<4x1xf32, #tpu.memory_space<vmem>>, %arg6: memref<1x4x256xf32, #tpu.memory_space<vmem>>) attributes {dimension_semantics = [#tpu.dimension_semantics<parallel>], iteration_bounds = array<i64: 2>, scalar_prefetch = 0 : i64, scratch_operands = 0 : i64, tpu.core_type = #tpu.core_type<tc>, window_params = [{transform_indices = @transform_0, window_bounds = array<i64: 1, 4, 256>}, {pipeline_mode = #tpu.pipeline_mode<synchronous>, transform_indices = @transform_1, window_bounds = array<i64: 2, 4>}, {pipeline_mode = #tpu.pipeline_mode<synchronous>, transform_indices = @transform_2, window_bounds = array<i64: 2, 1>}, {pipeline_mode = #tpu.pipeline_mode<synchronous>, transform_indices = @transform_3, window_bounds = array<i64: 4, 2>}, {pipeline_mode = #tpu.pipeline_mode<synchronous>, transform_indices = @transform_4, window_bounds = array<i64: 4, 1>}, {transform_indices = @transform_5, window_bounds = array<i64: 1, 4, 256>}]} {
    %c0 = arith.constant 0 : index
    %c0_0 = arith.constant 0 : index
    %c0_1 = arith.constant 0 : index
    %0 = vector.load %arg1[%c0, %c0_0, %c0_1] : memref<1x4x256xf32, #tpu.memory_space<vmem>>, vector<1x4x256xf32>
    %1 = vector.shape_cast %0 : vector<1x4x256xf32> to vector<4x256xf32>
    %cst = arith.constant dense<0.000000e+00> : vector<4xf32>
    %2 = vector.multi_reduction <add>, %1, %cst [1] : vector<4x256xf32> to vector<4xf32>
    %3 = vector.shape_cast %2 : vector<4xf32> to vector<4x1xf32>
    %cst_2 = arith.constant 3.906250e-03 : f32
    %4 = vector.broadcast %cst_2 : f32 to vector<4x1xf32>
    %5 = arith.mulf %3, %4 : vector<4x1xf32>
    %6 = vector.shape_cast %5 : vector<4x1xf32> to vector<4x1xf32>
    %7 = vector.broadcast %6 : vector<4x1xf32> to vector<4x128xf32>
    %c0_3 = arith.constant 0 : index
    %c0_4 = arith.constant 0 : index
    %8 = vector.load %arg2[%c0_3, %c0_4] : memref<2x4xf32, #tpu.memory_space<vmem>>, vector<2x4xf32>
    %cst_5 = arith.constant dense<0.000000e+00> : vector<2x128xf32>
    %9 = tpu.matmul %8, %7, %cst_5 {dimension_numbers = #tpu.dot_dimension_numbers<[1], [0], [0], [1], [0, 0, 1, 1], [], []>} : vector<2x4xf32>, vector<4x128xf32>, vector<2x128xf32> -> vector<2x128xf32>
    %c0_6 = arith.constant 0 : index
    %c0_7 = arith.constant 0 : index
    %10 = vector.load %arg3[%c0_6, %c0_7] : memref<2x1xf32, #tpu.memory_space<vmem>>, vector<2x1xf32>
    %11 = vector.broadcast %10 : vector<2x1xf32> to vector<2x128xf32>
    %12 = arith.addf %9, %11 : vector<2x128xf32>
    %cst_8 = arith.constant 0.000000e+00 : f32
    %13 = vector.broadcast %cst_8 : f32 to vector<2x128xf32>
    %14 = arith.maximumf %12, %13 : vector<2x128xf32>
    %c0_9 = arith.constant 0 : index
    %c0_10 = arith.constant 0 : index
    %15 = vector.load %arg4[%c0_9, %c0_10] : memref<4x2xf32, #tpu.memory_space<vmem>>, vector<4x2xf32>
    %cst_11 = arith.constant dense<0.000000e+00> : vector<4x128xf32>
    %16 = tpu.matmul %15, %14, %cst_11 {dimension_numbers = #tpu.dot_dimension_numbers<[1], [0], [0], [1], [0, 0, 1, 1], [], []>} : vector<4x2xf32>, vector<2x128xf32>, vector<4x128xf32> -> vector<4x128xf32>
    %c0_12 = arith.constant 0 : index
    %c0_13 = arith.constant 0 : index
    %17 = vector.load %arg5[%c0_12, %c0_13] : memref<4x1xf32, #tpu.memory_space<vmem>>, vector<4x1xf32>
    %18 = vector.broadcast %17 : vector<4x1xf32> to vector<4x128xf32>
    %19 = arith.addf %16, %18 : vector<4x128xf32>
    %20 = vector.extract_strided_slice %19 {offsets = [0, 0], sizes = [4, 1], strides = [1, 1]} : vector<4x128xf32> to vector<4x1xf32>
    %cst_14 = arith.constant 0.000000e+00 : f32
    %21 = vector.broadcast %cst_14 : f32 to vector<4x1xf32>
    %22 = arith.subf %21, %20 : vector<4x1xf32>
    %23 = math.exp %22 : vector<4x1xf32>
    %cst_15 = arith.constant 1.000000e+00 : f32
    %24 = vector.broadcast %cst_15 : f32 to vector<4x1xf32>
    %25 = arith.addf %24, %23 : vector<4x1xf32>
    %cst_16 = arith.constant 1.000000e+00 : f32
    %26 = vector.broadcast %cst_16 : f32 to vector<4x1xf32>
    %27 = arith.divf %26, %25 : vector<4x1xf32>
    %28 = vector.broadcast %27 : vector<4x1xf32> to vector<4x256xf32>
    %29 = arith.mulf %1, %28 : vector<4x256xf32>
    %c0_17 = arith.constant 0 : index
    %c0_18 = arith.constant 0 : index
    %c0_19 = arith.constant 0 : index
    %30 = vector.load %arg6[%c0_17, %c0_18, %c0_19] : memref<1x4x256xf32, #tpu.memory_space<vmem>>, vector<1x4x256xf32>
    %31 = vector.shape_cast %30 : vector<1x4x256xf32> to vector<4x256xf32>
    %32 = vector.shape_cast %29 : vector<4x256xf32> to vector<1x4x256xf32>
    tpu.vector_store %arg6[%c0_17, %c0_18, %c0_19], %32 {strides = array<i32>} : memref<1x4x256xf32, #tpu.memory_space<vmem>>, vector<1x4x256xf32>,
    return
  }
  func.func @transform_0(%arg0: i32) -> (i32, i32, i32) {
    %c0_i32 = arith.constant 0 : i32
    %c0_i32_0 = arith.constant 0 : i32
    %c0_i32_1 = arith.constant 0 : i32
    return %arg0, %c0_i32, %c0_i32_0 : i32, i32, i32
  }
  func.func @transform_1(%arg0: i32) -> (i32, i32) {
    %c0_i32 = arith.constant 0 : i32
    %c0_i32_0 = arith.constant 0 : i32
    %c0_i32_1 = arith.constant 0 : i32
    return %c0_i32, %c0_i32_0 : i32, i32
  }
  func.func @transform_2(%arg0: i32) -> (i32, i32) {
    %c0_i32 = arith.constant 0 : i32
    %c0_i32_0 = arith.constant 0 : i32
    %c0_i32_1 = arith.constant 0 : i32
    return %c0_i32, %c0_i32_0 : i32, i32
  }
  func.func @transform_3(%arg0: i32) -> (i32, i32) {
    %c0_i32 = arith.constant 0 : i32
    %c0_i32_0 = arith.constant 0 : i32
    %c0_i32_1 = arith.constant 0 : i32
    return %c0_i32, %c0_i32_0 : i32, i32
  }
  func.func @transform_4(%arg0: i32) -> (i32, i32) {
    %c0_i32 = arith.constant 0 : i32
    %c0_i32_0 = arith.constant 0 : i32
    %c0_i32_1 = arith.constant 0 : i32
    return %c0_i32, %c0_i32_0 : i32, i32
  }
  func.func @transform_5(%arg0: i32) -> (i32, i32, i32) {
    %c0_i32 = arith.constant 0 : i32
    %c0_i32_0 = arith.constant 0 : i32
    %c0_i32_1 = arith.constant 0 : i32
    return %arg0, %c0_i32, %c0_i32_0 : i32, i32, i32
  }
}

</mosaic_0001>

<llo_original>
// kernel: tpu_custom_call.1
$region0: #{tpu_custom_call.1}
  #allocation0 [shape = 'u32[]', space=smem, size = 0x4, offset = 0x4, fixed_abs, tag = 'smem constant byte address 0x4 - core index']
  #allocation1 [shape = 'u32[144,128]{1,0:T(1,128)}', space=vmem, size = 0x12000, scoped, tag = 'internal scratch']
  %s0 = inlined_call_operand.hbm [shape: f32[2,4,256], index: 0, kind: input, shape index: {}]
  %s1 = inlined_call_operand.vmem [shape: f32[2,4], index: 1, kind: input, shape index: {}]
  %s2 = inlined_call_operand.vmem [shape: f32[2,1], index: 2, kind: input, shape index: {}]
  %s3 = inlined_call_operand.vmem [shape: f32[4,2], index: 3, kind: input, shape index: {}]
  %s4 = inlined_call_operand.vmem [shape: f32[4,1], index: 4, kind: input, shape index: {}]
  %s5 = inlined_call_operand.hbm [shape: f32[2,4,256], index: 5, kind: output, shape index: {}]
  %s6 = sld [smem:[#allocation0]]
  $region57: #{tpu_custom_call.1} parent=0
    _
  %s8 = ssub.s32 1, %s6
  %s9 = scalar_select 0, %s8, %s6
  $region1: #{tpu_custom_call.1} parent=0
    #allocation2 [shape = 'u8[8192]{0}', space=vmem, size = 0x2000, scoped, tag = 'input window, operand 0']
    #allocation3 [shape = 's32[2]{0}', space=sflag, size = 0x8, scoped, tag = 'scoped memory for tpu_custom_call.1']
    #allocation4 [shape = 's32[2]{0}', space=sflag, size = 0x8, scoped, tag = 'scoped memory for tpu_custom_call.1']
    #allocation5 [shape = 'u8[8192]{0}', space=vmem, size = 0x2000, scoped, tag = 'output window, operand 0']
    %10 = vsyncpa [#allocation3], 0
    %s11 = scalar_lea.sflag [#allocation3], 1
    %12 = vsyncpa %s11, 0
    %13 = vsyncpa [#allocation4], 0
    %s14 = scalar_lea.sflag [#allocation4], 1
    %15 = vsyncpa %s14, 0
    loop: start=0, step=1, limit=4
    $region2: #{tpu_custom_call.1} parent=1 // loop_pre_header
      _
    $region3: #{tpu_custom_call.1} parent=1 // loop_header
      %s17 = sphi 0, %s21
      %p18 = scmp.ge.s32.totalorder %s17, 4
      %s27 = sphi 0, %s29
      %s30 = sphi 0, %s27
      %s31 = sphi 0, %s30
      %s47 = sphi 0, %s31
      %s51 = sphi 0, %s51
      %s53 = sphi 0, %s51
      %s54 = sphi 0, %s53
      %s68 = sphi 0, %s54
      %s72 = sphi 0, %s72
      %s74 = sphi 0, %s72
      %s75 = sphi 0, %s74
      %s89 = sphi 0, %s75
      %s93 = sphi 0, %s93
      %s95 = sphi 0, %s93
      %s96 = sphi 0, %s95
      %s110 = sphi 0, %s96
      %s114 = sphi 0, %s114
      %s116 = sphi 0, %s114
      %s117 = sphi 0, %s116
      %s131 = sphi 0, %s117
      %s137 = sphi 0, %s139
      %s140 = sphi 0, %s137
      %s141 = sphi 0, %s140
      %s157 = sphi 0, %s141
    $region4: #{tpu_custom_call.1} parent=1 // loop_header_branch
      %20 = sbr.rel (%p18) target = $region8
    $region5: #{tpu_custom_call.1} parent=1 // loop_body
      %s22 = ssub.s32 %s17, 1
      %s23 = ssub.s32 %s17, 2
      %s24 = sadd.s32 %s17, 1
      %s25 = ssub.s32 %s17, %s24
      %p26 = scmp.eq.s32.totalorder %s25, 0
      %s28 = sadd.s32 %s27, 1
      %s29 = scalar_select %p26, %s27, %s28
      %p32 = pneg %p26
      %p33 = scmp.eq.s32.totalorder %s17, 1
      %p34 = por %p32, %p33
      %p35 = scmp.ne.s32.totalorder %s27, %s30
      %p36 = scmp.eq.s32.totalorder %s17, 0
      %p37 = por %p35, %p36
      %p38 = scmp.ne.s32.totalorder %s27, %s30
      %p39 = scmp.eq.s32.totalorder %s22, 1
      %p40 = por %p38, %p39
      %p41 = scmp.ne.s32.totalorder %s30, %s31
      %p42 = scmp.eq.s32.totalorder %s22, 0
      %p43 = por %p41, %p42
      %p44 = scmp.ne.s32.totalorder %s30, %s31
      %p45 = scmp.eq.s32.totalorder %s23, 1
      %p46 = por %p44, %p45
      %p48 = scmp.ne.s32.totalorder %s31, %s47
      %p49 = scmp.eq.s32.totalorder %s23, 0
      %p50 = por %p48, %p49
      %s52 = sadd.s32 %s51, 1
      %p55 = scmp.eq.s32.totalorder %s17, 1
      %p56 = scmp.ne.s32.totalorder %s51, %s53
      %p57 = scmp.eq.s32.totalorder %s17, 0
      %p58 = por %p56, %p57
      %p59 = scmp.ne.s32.totalorder %s51, %s53
      %p60 = scmp.eq.s32.totalorder %s22, 1
      %p61 = por %p59, %p60
      %p62 = scmp.ne.s32.totalorder %s53, %s54
      %p63 = scmp.eq.s32.totalorder %s22, 0
      %p64 = por %p62, %p63
      %p65 = scmp.ne.s32.totalorder %s53, %s54
      %p66 = scmp.eq.s32.totalorder %s23, 1
      %p67 = por %p65, %p66
      %p69 = scmp.ne.s32.totalorder %s54, %s68
      %p70 = scmp.eq.s32.totalorder %s23, 0
      %p71 = por %p69, %p70
      %s73 = sadd.s32 %s72, 1
      %p76 = scmp.eq.s32.totalorder %s17, 1
      %p77 = scmp.ne.s32.totalorder %s72, %s74
      %p78 = scmp.eq.s32.totalorder %s17, 0
      %p79 = por %p77, %p78
      %p80 = scmp.ne.s32.totalorder %s72, %s74
      %p81 = scmp.eq.s32.totalorder %s22, 1
      %p82 = por %p80, %p81
      %p83 = scmp.ne.s32.totalorder %s74, %s75
      %p84 = scmp.eq.s32.totalorder %s22, 0
      %p85 = por %p83, %p84
      %p86 = scmp.ne.s32.totalorder %s74, %s75
      %p87 = scmp.eq.s32.totalorder %s23, 1
      %p88 = por %p86, %p87
      %p90 = scmp.ne.s32.totalorder %s75, %s89
      %p91 = scmp.eq.s32.totalorder %s23, 0
      %p92 = por %p90, %p91
      %s94 = sadd.s32 %s93, 1
      %p97 = scmp.eq.s32.totalorder %s17, 1
      %p98 = scmp.ne.s32.totalorder %s93, %s95
      %p99 = scmp.eq.s32.totalorder %s17, 0
      %p100 = por %p98, %p99
      %p101 = scmp.ne.s32.totalorder %s93, %s95
      %p102 = scmp.eq.s32.totalorder %s22, 1
      %p103 = por %p101, %p102
      %p104 = scmp.ne.s32.totalorder %s95, %s96
      %p105 = scmp.eq.s32.totalorder %s22, 0
      %p106 = por %p104, %p105
      %p107 = scmp.ne.s32.totalorder %s95, %s96
      %p108 = scmp.eq.s32.totalorder %s23, 1
      %p109 = por %p107, %p108
      %p111 = scmp.ne.s32.totalorder %s96, %s110
      %p112 = scmp.eq.s32.totalorder %s23, 0
      %p113 = por %p111, %p112
      %s115 = sadd.s32 %s114, 1
      %p118 = scmp.eq.s32.totalorder %s17, 1
      %p119 = scmp.ne.s32.totalorder %s114, %s116
      %p120 = scmp.eq.s32.totalorder %s17, 0
      %p121 = por %p119, %p120
      %p122 = scmp.ne.s32.totalorder %s114, %s116
      %p123 = scmp.eq.s32.totalorder %s22, 1
      %p124 = por %p122, %p123
      %p125 = scmp.ne.s32.totalorder %s116, %s117
      %p126 = scmp.eq.s32.totalorder %s22, 0
      %p127 = por %p125, %p126
      %p128 = scmp.ne.s32.totalorder %s116, %s117
      %p129 = scmp.eq.s32.totalorder %s23, 1
      %p130 = por %p128, %p129
      %p132 = scmp.ne.s32.totalorder %s117, %s131
      %p133 = scmp.eq.s32.totalorder %s23, 0
      %p134 = por %p132, %p133
      %s135 = ssub.s32 %s17, %s24
      %p136 = scmp.eq.s32.totalorder %s135, 0
      %s138 = sadd.s32 %s137, 1
      %s139 = scalar_select %p136, %s137, %s138
      %p142 = pneg %p136
      %p143 = scmp.eq.s32.totalorder %s17, 1
      %p144 = por %p142, %p143
      %p145 = scmp.ne.s32.totalorder %s137, %s140
      %p146 = scmp.eq.s32.totalorder %s17, 0
      %p147 = por %p145, %p146
      %p148 = scmp.ne.s32.totalorder %s137, %s140
      %p149 = scmp.eq.s32.totalorder %s22, 1
      %p150 = por %p148, %p149
      %p151 = scmp.ne.s32.totalorder %s140, %s141
      %p152 = scmp.eq.s32.totalorder %s22, 0
      %p153 = por %p151, %p152
      %p154 = scmp.ne.s32.totalorder %s140, %s141
      %p155 = scmp.eq.s32.totalorder %s23, 1
      %p156 = por %p154, %p155
      %p158 = scmp.ne.s32.totalorder %s141, %s157
      %p159 = scmp.eq.s32.totalorder %s23, 0
      %p160 = por %p158, %p159
      %p161 = scmp.le.s32.totalorder 1, %s17
      %p162 = scmp.lt.s32.totalorder %s17, 3
      %p163 = pnand %p161, %p162
      %p164 = pneg %p163
      // Predicated region
      $region9: #{tpu_custom_call.1} parent=5 // pred_check
        _
      $region10: #{tpu_custom_call.1} parent=5 // pred_check_branch
        %166 = sbr.rel (%p163) target = $region12
      $region11: #{tpu_custom_call.1} parent=5 // pred_region
        %s167 = ssub.s32 %s17, 1
        // Predicated region
        $region13: #{tpu_custom_call.1} parent=11 // pred_check
          %p168 = pneg %p64
        $region14: #{tpu_custom_call.1} parent=11 // pred_check_branch
          %170 = sbr.rel (%p168) target = $region16
        $region15: #{tpu_custom_call.1} parent=11 // pred_region
          _
        $region16: #{tpu_custom_call.1} parent=11 // pred_fallthru
          _
        // Predicated region
        $region17: #{tpu_custom_call.1} parent=11 // pred_check
          %p171 = pneg %p85
        $region18: #{tpu_custom_call.1} parent=11 // pred_check_branch
          %173 = sbr.rel (%p171) target = $region20
        $region19: #{tpu_custom_call.1} parent=11 // pred_region
          _
        $region20: #{tpu_custom_call.1} parent=11 // pred_fallthru
          _
        // Predicated region
        $region21: #{tpu_custom_call.1} parent=11 // pred_check
          %p174 = pneg %p106
        $region22: #{tpu_custom_call.1} parent=11 // pred_check_branch
          %176 = sbr.rel (%p174) target = $region24
        $region23: #{tpu_custom_call.1} parent=11 // pred_region
          _
        $region24: #{tpu_custom_call.1} parent=11 // pred_fallthru
          _
        // Predicated region
        $region25: #{tpu_custom_call.1} parent=11 // pred_check
          %p177 = pneg %p127
        $region26: #{tpu_custom_call.1} parent=11 // pred_check_branch
          %179 = sbr.rel (%p177) target = $region28
        $region27: #{tpu_custom_call.1} parent=11 // pred_region
          _
        $region28: #{tpu_custom_call.1} parent=11 // pred_fallthru
          _
      $region12: #{tpu_custom_call.1} parent=5 // pred_fallthru
        _
      %p180 = scmp.lt.s32.totalorder %s17, 2
      // Predicated region
      $region29: #{tpu_custom_call.1} parent=5 // pred_check
        %p181 = pneg %p180
      $region30: #{tpu_custom_call.1} parent=5 // pred_check_branch
        %183 = sbr.rel (%p181) target = $region32
      $region31: #{tpu_custom_call.1} parent=5 // pred_region
        // Predicated region
        $region33: #{tpu_custom_call.1} parent=31 // pred_check
          %p184 = pneg %p37
        $region34: #{tpu_custom_call.1} parent=31 // pred_check_branch
          %186 = sbr.rel (%p184) target = $region36
        $region35: #{tpu_custom_call.1} parent=31 // pred_region
          %s187 = sand.u32 %s27, 1
          %s188 = scalar_lea.sflag [#allocation3], %s187
          %s189 = sand.u32 %s27, 1
          %s190 = smul.addr %s189, 8
          %s191 = scalar_lea.vmem [#allocation2], %s190
          %s193 = ssub.s32 128, 128
          %194 = vsyncadd %s188, %s193
          %s195 = smul.addr %s17, 2
          %s196 = smul.addr %s195, 64
          %s197 = scalar_lea.hbm %s0, %s196
          %s199 = sshll.u32 %s191, 4
          %s200 = int_to_ptr.vmem [resolvable:$true] %s199
          %202 = dma.hbm_to_vmem [thread:$0]  %s197, 128, %s200, %s188
        $region36: #{tpu_custom_call.1} parent=31 // pred_fallthru
          _
      $region32: #{tpu_custom_call.1} parent=5 // pred_fallthru
        _
      %p203 = scmp.le.s32.totalorder 1, %s17
      %p204 = scmp.lt.s32.totalorder %s17, 3
      %p205 = pnand %p203, %p204
      %p206 = pneg %p205
      // Predicated region
      $region37: #{tpu_custom_call.1} parent=5 // pred_check
        _
      $region38: #{tpu_custom_call.1} parent=5 // pred_check_branch
        %208 = sbr.rel (%p205) target = $region40
      $region39: #{tpu_custom_call.1} parent=5 // pred_region
        %s209 = ssub.s32 %s17, 1
        %s210 = sand.u32 %s30, 1
        %s211 = scalar_lea.sflag [#allocation3], %s210
        %s212 = sand.u32 %s30, 1
        %s213 = smul.addr %s212, 8
        %s214 = scalar_lea.vmem [#allocation2], %s213
        // Predicated region
        $region41: #{tpu_custom_call.1} parent=39 // pred_check
          %p215 = pneg %p43
        $region42: #{tpu_custom_call.1} parent=39 // pred_check_branch
          %217 = sbr.rel (%p215) target = $region44
        $region43: #{tpu_custom_call.1} parent=39 // pred_region
          %218 = dma.done %s211, 128
        $region44: #{tpu_custom_call.1} parent=39 // pred_fallthru
          _
        %s219 = sand.u32 %s30, 1
        %s220 = scalar_lea.sflag [#allocation3], %s219
        %s221 = sand.u32 %s30, 1
        %s222 = smul.addr %s221, 8
        %s223 = scalar_lea.vmem [#allocation2], %s222
        %p224 = pneg %p43
        %p225 = pneg %p40
        %p226 = pneg %p64
        %p227 = pneg %p61
        %p228 = pneg %p85
        %p229 = pneg %p82
        %p230 = pneg %p106
        %p231 = pneg %p103
        %p232 = pneg %p127
        %p233 = pneg %p124
        %p234 = pneg %p153
        %p235 = pneg %p150
        %s236 = sand.u32 %s140, 1
        %s237 = scalar_lea.sflag [#allocation4], %s236
        %s238 = sand.u32 %s140, 1
        %s239 = smul.addr %s238, 8
        %s240 = scalar_lea.vmem [#allocation5], %s239
        %v241 = vld [vmem:[%s214] sm:$0xff]
        %v243 = vcombine.high %v241, %v241
        %vm245 = vcmask 1043456
        %v246 = vsel %vm245, %v241, 0.0
        %v247 = vsel %vm245, %v243, 0.0
        %v248 = vadd.f32 %v246, %v247
        %249 = vadd.xlane.f32.xlu0 %v248
        %v250 = vpop.xlane.xlu0 %249
        %v251 = vmul.f32 %v250, 0.00390625
        %v252 = vld [vmem:[%s1] sm:$0x3]
        %v253 = vld [vmem:[%s2] sm:$0x3]
        %255 = vset.pattern.permute.xlu0 0
        %256 = vperm.xlu0 %255, %v253
        %v257 = vpop.permute.xlu0 %256
        %vm259 = vcmask 31744
        %v261 = vsel %vm259, %v252, 0
        %v264 = vsel %vm245, %v251, 0
        %266 = vmatprep.subr.mxu0 0.0
        %267 = vmatpush1.msra.mxu0 %v264
        %268 = vmatprep.subr.mxu0 0.0
        %269 = vmatpush1.msra.mxu0 0.0
        %270 = vmatprep.subr.mxu0 0.0
        %271 = vmatpush1.msra.mxu0 0.0
        %272 = vmatprep.subr.mxu0 0.0
        %273 = vmatpush1.msra.mxu0 0.0
        %274 = vmatprep.subr.mxu0 0.0
        %275 = vmatpush1.msra.mxu0 0.0
        %276 = vmatprep.subr.mxu0 0.0
        %277 = vmatpush1.msra.mxu0 0.0
        %278 = vmatprep.subr.mxu0 0.0
        %279 = vmatpush1.msra.mxu0 0.0
        %280 = vmatprep.subr.mxu0 0.0
        %281 = vmatpush1.msra.mxu0 0.0
        %282 = vmatprep.subr.mxu0 0.0
        %283 = vmatpush1.msra.mxu0 0.0
        %284 = vmatprep.subr.mxu0 0.0
        %285 = vmatpush1.msra.mxu0 0.0
        %286 = vmatprep.subr.mxu0 0.0
        %287 = vmatpush1.msra.mxu0 0.0
        %288 = vmatprep.subr.mxu0 0.0
        %289 = vmatpush1.msra.mxu0 0.0
        %290 = vmatprep.subr.mxu0 0.0
        %291 = vmatpush1.msra.mxu0 0.0
        %292 = vmatprep.subr.mxu0 0.0
        %293 = vmatpush1.msra.mxu0 0.0
        %294 = vmatprep.subr.mxu0 0.0
        %295 = vmatpush1.msra.mxu0 0.0
        %296 = vmatprep.subr.mxu0 0.0
        %297 = vmatpush1.msra.mxu0 0.0
        %298 = vmatprep.subr.mxu0 0.0
        %299 = vmatpush1.msra.mxu0 0.0
        %300 = vmatprep.subr.mxu0 0.0
        %301 = vmatpush1.msra.mxu0 0.0
        %302 = vmatprep.subr.mxu0 0.0
        %303 = vmatpush1.msra.mxu0 0.0
        %304 = vmatprep.subr.mxu0 0.0
        %305 = vmatpush1.msra.mxu0 0.0
        %306 = vmatprep.subr.mxu0 0.0
        %307 = vmatpush1.msra.mxu0 0.0
        %308 = vmatprep.subr.mxu0 0.0
        %309 = vmatpush1.msra.mxu0 0.0
        %310 = vmatprep.subr.mxu0 0.0
        %311 = vmatpush1.msra.mxu0 0.0
        %312 = vmatprep.subr.mxu0 0.0
        %313 = vmatpush1.msra.mxu0 0.0
        %314 = vmatprep.subr.mxu0 0.0
        %315 = vmatpush1.msra.mxu0 0.0
        %316 = vmatprep.subr.mxu0 0.0
        %317 = vmatpush1.msra.mxu0 0.0
        %318 = vmatprep.subr.mxu0 0.0
        %319 = vmatpush1.msra.mxu0 0.0
        %320 = vmatprep.subr.mxu0 0.0
        %321 = vmatpush1.msra.mxu0 0.0
        %322 = vmatprep.subr.mxu0 0.0
        %323 = vmatpush1.msra.mxu0 0.0
        %324 = vmatprep.subr.mxu0 0.0
        %325 = vmatpush1.msra.mxu0 0.0
        %326 = vmatprep.subr.mxu0 0.0
        %327 = vmatpush1.msra.mxu0 0.0
        %328 = vmatprep.subr.mxu0 0.0
        %329 = vmatpush1.msra.mxu0 0.0
        %330 = vmatprep.mubr.f32.mxu0 0.0
        %331 = vmatmul.mubr.f32.gmra.mrb[0].mxu0 %v261
        %v332 = vpop.f32.mrb[0].mxu0
        %v333 = vadd.f32 %v257, %v332
        %v334 = vpop.f32.mrb[0].mxu0
        %335 = vdwg.mxu0
        %v336 = vmax.f32 %v333, 0.0
        %v337 = vld [vmem:[%s3] sm:$0xf]
        %v338 = vld [vmem:[%s4] sm:$0xf]
        %340 = vset.pattern.permute.xlu0 0
        %341 = vperm.xlu0 %340, %v338
        %v342 = vpop.permute.xlu0 %341
        %vm344 = vcmask 15360
        %v346 = vsel %vm344, %v337, 0
        %vm348 = vcmask 1041408
        %v350 = vsel %vm348, %v336, 0
        %352 = vmatprep.subr.mxu0 0.0
        %353 = vmatpush1.msra.mxu0 %v350
        %354 = vmatprep.subr.mxu0 0.0
        %355 = vmatpush1.msra.mxu0 0.0
        %356 = vmatprep.subr.mxu0 0.0
        %357 = vmatpush1.msra.mxu0 0.0
        %358 = vmatprep.subr.mxu0 0.0
        %359 = vmatpush1.msra.mxu0 0.0
        %360 = vmatprep.subr.mxu0 0.0
        %361 = vmatpush1.msra.mxu0 0.0
        %362 = vmatprep.subr.mxu0 0.0
        %363 = vmatpush1.msra.mxu0 0.0
        %364 = vmatprep.subr.mxu0 0.0
        %365 = vmatpush1.msra.mxu0 0.0
        %366 = vmatprep.subr.mxu0 0.0
        %367 = vmatpush1.msra.mxu0 0.0
        %368 = vmatprep.subr.mxu0 0.0
        %369 = vmatpush1.msra.mxu0 0.0
        %370 = vmatprep.subr.mxu0 0.0
        %371 = vmatpush1.msra.mxu0 0.0
        %372 = vmatprep.subr.mxu0 0.0
        %373 = vmatpush1.msra.mxu0 0.0
        %374 = vmatprep.subr.mxu0 0.0
        %375 = vmatpush1.msra.mxu0 0.0
        %376 = vmatprep.subr.mxu0 0.0
        %377 = vmatpush1.msra.mxu0 0.0
        %378 = vmatprep.subr.mxu0 0.0
        %379 = vmatpush1.msra.mxu0 0.0
        %380 = vmatprep.subr.mxu0 0.0
        %381 = vmatpush1.msra.mxu0 0.0
        %382 = vmatprep.subr.mxu0 0.0
        %383 = vmatpush1.msra.mxu0 0.0
        %384 = vmatprep.subr.mxu0 0.0
        %385 = vmatpush1.msra.mxu0 0.0
        %386 = vmatprep.subr.mxu0 0.0
        %387 = vmatpush1.msra.mxu0 0.0
        %388 = vmatprep.subr.mxu0 0.0
        %389 = vmatpush1.msra.mxu0 0.0
        %390 = vmatprep.subr.mxu0 0.0
        %391 = vmatpush1.msra.mxu0 0.0
        %392 = vmatprep.subr.mxu0 0.0
        %393 = vmatpush1.msra.mxu0 0.0
        %394 = vmatprep.subr.mxu0 0.0
        %395 = vmatpush1.msra.mxu0 0.0
        %396 = vmatprep.subr.mxu0 0.0
        %397 = vmatpush1.msra.mxu0 0.0
        %398 = vmatprep.subr.mxu0 0.0
        %399 = vmatpush1.msra.mxu0 0.0
        %400 = vmatprep.subr.mxu0 0.0
        %401 = vmatpush1.msra.mxu0 0.0
        %402 = vmatprep.subr.mxu0 0.0
        %403 = vmatpush1.msra.mxu0 0.0
        %404 = vmatprep.subr.mxu0 0.0
        %405 = vmatpush1.msra.mxu0 0.0
        %406 = vmatprep.subr.mxu0 0.0
        %407 = vmatpush1.msra.mxu0 0.0
        %408 = vmatprep.subr.mxu0 0.0
        %409 = vmatpush1.msra.mxu0 0.0
        %410 = vmatprep.subr.mxu0 0.0
        %411 = vmatpush1.msra.mxu0 0.0
        %412 = vmatprep.subr.mxu0 0.0
        %413 = vmatpush1.msra.mxu0 0.0
        %414 = vmatprep.subr.mxu0 0.0
        %415 = vmatpush1.msra.mxu0 0.0
        %416 = vmatprep.mubr.f32.mxu0 0.0
        %417 = vmatmul.mubr.f32.gmra.mrb[0].mxu0 %v346
        %v418 = vpop.f32.mrb[0].mxu0
        %v419 = vadd.f32 %v342, %v418
        %v420 = vpop.f32.mrb[0].mxu0
        %421 = vdwg.mxu0
        %v422 = vsub.f32 0.0, %v419
        %v423 = vmul.f32 %v422, 1.442695
        %v424 = vpow.pop %v423
        %v425 = vadd.f32 %v424, 1.0
        %v426 = vrcp.pop %v425
        %v427 = vmul.f32 1.0, %v426
        %429 = vset.pattern.permute.xlu0 0
        %430 = vperm.xlu0 %429, %v427
        %v431 = vpop.permute.xlu0 %430
        %v433 = vunpack.c.l.s4 839922192
        %v434 = vunpack.c.0.s8 %v433
        %v435 = vlaneseq
        %v436 = vshrl.u32 %v435, 7
        %v437 = vsub.s32 %v434, %v436
        %v438 = vrot.slane %v431, %v437
        %v440 = vmul.f32 %v241, %v438
        %441 = vst [vmem:[%s240] sm:$0xff] %v440
        %s442 = sand.u32 %s140, 1
        %s443 = scalar_lea.sflag [#allocation4], %s442
        %s444 = sand.u32 %s140, 1
        %s445 = smul.addr %s444, 8
        %s446 = scalar_lea.vmem [#allocation5], %s445
        // Predicated region
        $region45: #{tpu_custom_call.1} parent=39 // pred_check
          %p447 = pneg %p150
        $region46: #{tpu_custom_call.1} parent=39 // pred_check_branch
          %449 = sbr.rel (%p447) target = $region48
        $region47: #{tpu_custom_call.1} parent=39 // pred_region
          %s451 = ssub.s32 128, 128
          %452 = vsyncadd %s443, %s451
          %s453 = smul.addr %s22, 2
          %s454 = smul.addr %s453, 64
          %s455 = scalar_lea.hbm %s5, %s454
          %s457 = sshll.u32 %s446, 4
          %s458 = int_to_ptr.vmem [resolvable:$true] %s457
          %460 = dma.vmem_to_hbm [thread:$0]  %s458, 128, %s455, %s443
        $region48: #{tpu_custom_call.1} parent=39 // pred_fallthru
          _
      $region40: #{tpu_custom_call.1} parent=5 // pred_fallthru
        _
      %p461 = scmp.le.s32.totalorder 2, %s17
      // Predicated region
      $region49: #{tpu_custom_call.1} parent=5 // pred_check
        %p462 = pneg %p461
      $region50: #{tpu_custom_call.1} parent=5 // pred_check_branch
        %464 = sbr.rel (%p462) target = $region52
      $region51: #{tpu_custom_call.1} parent=5 // pred_region
        %s465 = ssub.s32 %s17, 2
        // Predicated region
        $region53: #{tpu_custom_call.1} parent=51 // pred_check
          %p466 = pneg %p156
        $region54: #{tpu_custom_call.1} parent=51 // pred_check_branch
          %468 = sbr.rel (%p466) target = $region56
        $region55: #{tpu_custom_call.1} parent=51 // pred_region
          %s469 = sand.u32 %s141, 1
          %s470 = scalar_lea.sflag [#allocation4], %s469
          %s471 = sand.u32 %s141, 1
          %s472 = smul.addr %s471, 8
          %s473 = scalar_lea.vmem [#allocation5], %s472
          %474 = dma.done %s470, 128
        $region56: #{tpu_custom_call.1} parent=51 // pred_fallthru
          _
      $region52: #{tpu_custom_call.1} parent=5 // pred_fallthru
        _
    $region6: #{tpu_custom_call.1} parent=1 // loop_footer
      %s21 = sadd.s32 1, %s17
    $region7: #{tpu_custom_call.1} parent=1 // loop_footer_branch
      %16 = sbr.rel target = $region3
    $region8: #{tpu_custom_call.1} parent=1 // loop_exit
      _
    %475 = vsyncpa [#allocation3], 1
    %s476 = scalar_lea.sflag [#allocation3], 1
    %477 = vsyncpa %s476, 1
    %478 = vsyncpa [#allocation4], 1
    %s479 = scalar_lea.sflag [#allocation4], 1
    %480 = vsyncpa %s479, 1

</llo_original>
